<compile_context>
chip_gen: v5e
topology: v5e:2x2
jax: 0.10.0
libtpu: 0.0.40
codegen_flags: <defaults>
</compile_context>

<pallas_src>
import functools
import math

import jax
import jax.numpy as jnp
from jax.experimental import pallas as pl
from jax.experimental.pallas import tpu as pltpu


VMEM_LIMIT = 64 * 1024 * 1024  # explicit scoped-VMEM budget (fits v5e/v6e/v7x)


# ------------------------------ tiling helper ------------------------------ #

def _pick_tile(dim, targets):
    """Largest target tile that evenly divides `dim`, else the full dim."""
    for t in targets:
        if dim % t == 0:
            return t
    return dim


# --------------------- per-head Q/K/V projection kernel --------------------- #

def _proj_head_kernel(x_ref, w_ref, b_ref, o_ref, *, transpose_out):
    # x_ref: (tm, U) f32, w_ref: (U, d_k) bf16, b_ref: (1, d_k) f32
    x = x_ref[...].astype(w_ref.dtype)                     # cast in-kernel (free VPU)
    y = jnp.dot(x, w_ref[...], preferred_element_type=jnp.float32)
    y = y + b_ref[...]
    if transpose_out:
        o_ref[...] = y.T.astype(o_ref.dtype)               # (d_k, tm) for K^T layout
    else:
        o_ref[...] = y.astype(o_ref.dtype)                 # (tm, d_k)


def project_heads(x, w_h, b_h, *, transpose_out):
    """x: (B,S,U) f32, w_h: (H,U,d_k) bf16, b_h: (H,1,d_k) f32.

    Returns (B,H,S,d_k) bf16, or (B,H,d_k,S) bf16 when transpose_out=True.
    No K-reduction grid axis: the full U contraction is done per block.
    """
    B, S, U = x.shape
    H, _, d_k = w_h.shape
    tm = _pick_tile(S, (512, 256, 128))
    grid = (B, S // tm, H)                                  # h innermost: x block reused

    if transpose_out:
        out_shape = jax.ShapeDtypeStruct((B, H, d_k, S), jnp.bfloat16)
        out_spec = pl.BlockSpec((None, None, d_k, tm), lambda b, si, h: (b, h, 0, si))
    else:
        out_shape = jax.ShapeDtypeStruct((B, H, S, d_k), jnp.bfloat16)
        out_spec = pl.BlockSpec((None, None, tm, d_k), lambda b, si, h: (b, h, si, 0))

    kernel = functools.partial(_proj_head_kernel, transpose_out=transpose_out)
    return pl.pallas_call(
        kernel,
        out_shape=out_shape,
        grid_spec=pltpu.PrefetchScalarGridSpec(
            num_scalar_prefetch=0,
            grid=grid,
            in_specs=[
                pl.BlockSpec((None, tm, U), lambda b, si, h: (b, si, 0)),
                pl.BlockSpec((None, U, d_k), lambda b, si, h: (h, 0, 0)),
                pl.BlockSpec((None, 1, d_k), lambda b, si, h: (h, 0, 0)),
            ],
            out_specs=out_spec,
        ),
        compiler_params=pltpu.CompilerParams(
            dimension_semantics=("parallel", "parallel", "parallel"),
            vmem_limit_bytes=VMEM_LIMIT),
    )(x, w_h, b_h)


# --------------------------- flash-style attention -------------------------- #

def _dropout_keep_mask(seed_ref, shape, keep_thresh):
    """Stateless counter-based RNG: murmur-style mix of (seed, b, h, qi, ki, r, c)."""
    b = pl.program_id(0).astype(jnp.uint32)
    h = pl.program_id(1).astype(jnp.uint32)
    qi = pl.program_id(2).astype(jnp.uint32)
    ki = pl.program_id(3).astype(jnp.uint32)
    base = (seed_ref[0].astype(jnp.uint32)
            ^ (b * jnp.uint32(0x9E3779B1))
            ^ (h * jnp.uint32(0x85EBCA77))
            ^ (qi * jnp.uint32(0xC2B2AE3D))
            ^ (ki * jnp.uint32(0x27D4EB2F)))
    r = jax.lax.broadcasted_iota(jnp.uint32, shape, 0)
    c = jax.lax.broadcasted_iota(jnp.uint32, shape, 1)
    x = base + r * jnp.uint32(0x9E3779B1) + c * jnp.uint32(0x85EBCA6B)
    x = x ^ (x >> 16)
    x = x * jnp.uint32(0x7FEB352D)
    x = x ^ (x >> 15)
    x = x * jnp.uint32(0x846CA68B)
    x = x ^ (x >> 16)
    return x < jnp.uint32(keep_thresh)


def _flash_head_kernel(seed_ref, q_ref, kt_ref, v_ref, mask_ref, o_ref,
                       m_sc, l_sc, acc_sc, *, keep_thresh, inv_keep, use_dropout):
    ki = pl.program_id(3)
    n_kv = pl.num_programs(3)

    @pl.when(ki == 0)
    def _():
        m_sc[...] = jnp.full(m_sc.shape, -jnp.inf, m_sc.dtype)
        l_sc[...] = jnp.zeros(l_sc.shape, l_sc.dtype)
        acc_sc[...] = jnp.zeros(acc_sc.shape, acc_sc.dtype)

    q = q_ref[...]                       # (tq, d_k) bf16, 1/sqrt(d_k) folded into Wq
    kt = kt_ref[...]                     # (d_k, tk) bf16 -- MXU-natural orientation
    v = v_ref[...]                       # (tk, d_k) bf16

    s = jnp.dot(q, kt, preferred_element_type=jnp.float32)        # (tq, tk) f32
    s = s + jnp.where(mask_ref[...] != 0, jnp.float32(0.0), jnp.float32(-1e10))

    m_prev = m_sc[...]                                             # (tq, 1)
    m_new = jnp.maximum(m_prev, jnp.max(s, axis=-1, keepdims=True))
    alpha = jnp.exp(m_prev - m_new)
    p = jnp.exp(s - m_new)                                         # unnormalized probs

    # denominator uses the *undropped* probabilities (F.dropout applied post-softmax)
    l_sc[...] = alpha * l_sc[...] + jnp.sum(p, axis=-1, keepdims=True)

    if use_dropout:
        keep = _dropout_keep_mask(seed_ref, p.shape, keep_thresh)
        p = jnp.where(keep, p, jnp.float32(0.0))

    acc_sc[...] = alpha * acc_sc[...] + jnp.dot(p.astype(v.dtype), v,
                                                preferred_element_type=jnp.float32)
    m_sc[...] = m_new

    @pl.when(ki == n_kv - 1)
    def _():
        # exact divide for the softmax normalization (review: avoid approx reciprocal)
        o_ref[...] = (acc_sc[...] * (inv_keep / l_sc[...])).astype(o_ref.dtype)


def flash_mha(q_h, kt_h, v_h, mask_i8, seed, *, dropout):
    """q_h/v_h: (B,H,S,d_k) bf16, kt_h: (B,H,d_k,S) bf16, mask_i8: (B,S,S) int8,
    seed: (1,) int32 -> (B,H,S,d_k) bf16."""
    B, H, S, d_k = q_h.shape
    tq = _pick_tile(S, (256, 128))
    tk = _pick_tile(S, (256, 128))
    use_dropout = dropout > 0.0
    keep_prob = 1.0 - dropout
    keep_thresh = min(int(keep_prob * 2**32), 2**32 - 1)
    inv_keep = 1.0 / keep_prob if use_dropout else 1.0

    kernel = functools.partial(
        _flash_head_kernel, keep_thresh=keep_thresh, inv_keep=inv_keep,
        use_dropout=use_dropout)

    return pl.pallas_call(
        kernel,
        out_shape=jax.ShapeDtypeStruct((B, H, S, d_k), jnp.bfloat16),
        grid_spec=pltpu.PrefetchScalarGridSpec(
            num_scalar_prefetch=1,
            grid=(B, H, S // tq, S // tk),
            in_specs=[
                pl.BlockSpec((None, None, tq, d_k), lambda b, h, qi, ki, sd: (b, h, qi, 0)),
                pl.BlockSpec((None, None, d_k, tk), lambda b, h, qi, ki, sd: (b, h, 0, ki)),
                pl.BlockSpec((None, None, tk, d_k), lambda b, h, qi, ki, sd: (b, h, ki, 0)),
                pl.BlockSpec((None, tq, tk), lambda b, h, qi, ki, sd: (b, qi, ki)),
            ],
            out_specs=pl.BlockSpec((None, None, tq, d_k),
                                   lambda b, h, qi, ki, sd: (b, h, qi, 0)),
            scratch_shapes=[
                pltpu.VMEM((tq, 1), jnp.float32),      # running max
                pltpu.VMEM((tq, 1), jnp.float32),      # running denom
                pltpu.VMEM((tq, d_k), jnp.float32),    # running numerator
            ],
        ),
        compiler_params=pltpu.CompilerParams(
            dimension_semantics=("parallel", "parallel", "parallel", "arbitrary"),
            vmem_limit_bytes=VMEM_LIMIT),
    )(seed, q_h, kt_h, v_h, mask_i8)


# ------------------------ output projection (fc layer) ---------------------- #

def _out_proj_kernel(ctx_ref, wo_ref, bo_ref, o_ref, acc_ref):
    h = pl.program_id(3)

    @pl.when(h == 0)
    def _():
        acc_ref[...] = jnp.zeros(acc_ref.shape, acc_ref.dtype)

    acc_ref[...] += jnp.dot(ctx_ref[...], wo_ref[...],
                            preferred_element_type=jnp.float32)

    @pl.when(h == pl.num_programs(3) - 1)
    def _():
        o_ref[...] = (acc_ref[...] + bo_ref[...]).astype(o_ref.dtype)


def out_projection(ctx, wo_h, bo, out_dtype=jnp.float32):
    """ctx: (B,H,S,d_k) bf16, wo_h: (H,d_k,U) bf16, bo: (1,U) f32 -> (B,S,U).

    Heads are the reduction grid axis, so no JAX-side head-merge transpose is
    needed between the flash kernel and this fc; output blocks are lane-dense.
    """
    B, H, S, d_k = ctx.shape
    U = wo_h.shape[2]
    tm = _pick_tile(S, (512, 256, 128))
    tn = _pick_tile(U, (512, 256, 128))
    grid = (B, S // tm, U // tn, H)

    return pl.pallas_call(
        _out_proj_kernel,
        out_shape=jax.ShapeDtypeStruct((B, S, U), out_dtype),
        grid_spec=pltpu.PrefetchScalarGridSpec(
            num_scalar_prefetch=0,
            grid=grid,
            in_specs=[
                pl.BlockSpec((None, None, tm, d_k), lambda b, si, j, h: (b, h, si, 0)),
                pl.BlockSpec((None, d_k, tn), lambda b, si, j, h: (h, 0, j)),
                pl.BlockSpec((1, tn), lambda b, si, j, h: (0, j)),
            ],
            out_specs=pl.BlockSpec((None, tm, tn), lambda b, si, j, h: (b, si, j)),
            scratch_shapes=[pltpu.VMEM((tm, tn), jnp.float32)],
        ),
        compiler_params=pltpu.CompilerParams(
            dimension_semantics=("parallel", "parallel", "parallel", "arbitrary"),
            vmem_limit_bytes=VMEM_LIMIT),
    )(ctx, wo_h, bo)


# --------------------------- module-level wrapper --------------------------- #

class MultiHeadedAttentionPallas:
    def __init__(self, n_heads, n_units, dropout=0.1, key=None):
        assert n_units % n_heads == 0, f"{n_heads} heads not divisible into {n_units}"
        self.n_heads = n_heads
        self.n_units = n_units
        self.d_k = n_units // n_heads
        self.dropout = dropout
        if key is None:
            key = jax.random.PRNGKey(0)
        ks = jax.random.split(key, 8)
        bound = 1.0 / math.sqrt(n_units)   # PyTorch nn.Linear default init bound

        def w(k):
            return jax.random.uniform(k, (n_units, n_units), jnp.float32, -bound, bound)

        def b(k):
            return jax.random.uniform(k, (n_units,), jnp.float32, -bound, bound)

        # f32 originals (kept for the pure-JAX reference).
        self.wq, self.bq = w(ks[0]), b(ks[1])
        self.wk, self.bk = w(ks[2]), b(ks[3])
        self.wv, self.bv = w(ks[4]), b(ks[5])
        self.wo, self.bo = w(ks[6]), b(ks[7])

        H, d_k = n_heads, self.d_k
        scale = 1.0 / math.sqrt(d_k)

        def split_heads(w_t):   # (U_in, U_out) -> (H, U_in, d_k)
            return w_t.reshape(n_units, H, d_k).transpose(1, 0, 2)

        # Kernel-side per-head parameters (bf16 weights, f32 biases); 1/sqrt(d_k)
        # score scale folded into the Q projection.
        self.wq_h = split_heads(self.wq.T * scale).astype(jnp.bfloat16)   # (H, U, d_k)
        self.bq_h = (self.bq * scale).reshape(H, 1, d_k)
        self.wk_h = split_heads(self.wk.T).astype(jnp.bfloat16)
        self.bk_h = self.bk.reshape(H, 1, d_k)
        self.wv_h = split_heads(self.wv.T).astype(jnp.bfloat16)
        self.bv_h = self.bv.reshape(H, 1, d_k)
        self.wo_h = self.wo.T.reshape(H, d_k, n_units).astype(jnp.bfloat16)  # (H, d_k, U)
        self.bo_r = self.bo.reshape(1, n_units)

    def __call__(self, query, key, value, mask, dropout_seed=0):
        # per-head projections; K is written pre-transposed (B,H,d_k,S) so the
        # flash kernel's QK^T contraction is MXU-natural.
        q_h = project_heads(query, self.wq_h, self.bq_h, transpose_out=False)
        kT_h = project_heads(key, self.wk_h, self.bk_h, transpose_out=True)
        v_h = project_heads(value, self.wv_h, self.bv_h, transpose_out=False)

        mask_i8 = (mask > 0).astype(jnp.int8)             # 4x less mask bandwidth
        seed = jnp.asarray([dropout_seed], dtype=jnp.int32)

        ctx = flash_mha(q_h, kT_h, v_h, mask_i8, seed, dropout=self.dropout)
        return out_projection(ctx, self.wo_h, self.bo_r, jnp.float32)


# ------------------------------ pure-JAX ref -------------------------------- #

def reference_mha(mod, query, key, value, mask):
    """f32 reference of the PyTorch module forward (dropout disabled)."""
    hi = jax.lax.Precision.HIGHEST
    B, S, U = query.shape
    H, d_k = mod.n_heads, mod.d_k

    def lin(x, w, b):
        return jnp.einsum("bsu,vu->bsv", x, w, precision=hi) + b

    Q = lin(query, mod.wq, mod.bq).reshape(B, S, H, d_k).transpose(0, 2, 1, 3)
    K = lin(key, mod.wk, mod.bk).reshape(B, S, H, d_k).transpose(0, 2, 1, 3)
    V = lin(value, mod.wv, mod.bv).reshape(B, S, H, d_k).transpose(0, 2, 1, 3)
    m = mask.astype(jnp.float32)[:, None, :, :]
    A = jnp.einsum("bhqd,bhkd->bhqk", Q, K, precision=hi) / math.sqrt(d_k)
    A = A * m - 1e10 * (1.0 - m)
    A = jax.nn.softmax(A, axis=-1)
    ctx = jnp.einsum("bhqk,bhkd->bhqd", A, V, precision=hi)
    ctx = ctx.transpose(0, 2, 1, 3).reshape(B, S, U)
    return jnp.einsum("bsu,vu->bsv", ctx, mod.wo, precision=hi) + mod.bo


# ----------------------------------- main ----------------------------------- #

if __name__ == "__main__":
    n_heads, n_units = 4, 32
    B, S = 2, 8

    root = jax.random.PRNGKey(0)
    k_param, k_q, k_k, k_v = jax.random.split(root, 4)

    query = jax.random.normal(k_q, (B, S, n_units), jnp.float32)
    key = jax.random.normal(k_k, (B, S, n_units), jnp.float32)
    value = jax.random.normal(k_v, (B, S, n_units), jnp.float32)
    mask = jnp.broadcast_to(jnp.tril(jnp.ones((S, S), jnp.float32)), (B, S, S))

    # --- deterministic path (dropout disabled): exact check vs f32 reference ---
    mod_eval = MultiHeadedAttentionPallas(n_heads, n_units, dropout=0.0, key=k_param)
    out_eval = jax.block_until_ready(mod_eval(query, key, value, mask))
    ref_eval = reference_mha(mod_eval, query, key, value, mask)
    assert out_eval.shape == (B, S, n_units)
    assert bool(jnp.all(jnp.isfinite(out_eval)))
    assert bool(jnp.allclose(out_eval, ref_eval, rtol=2e-2, atol=2e-2)), \
        float(jnp.max(jnp.abs(out_eval - ref_eval)))

    # --- dropout path: keep mask generated in-kernel by the hash RNG ---
    # TODO(synk): torch's F.dropout RNG stream cannot be reproduced, so the
    # exact-value comparison above is done with dropout=0; here we only check
    # the stochastic forward runs and stays finite.
    mod_train = MultiHeadedAttentionPallas(n_heads, n_units, dropout=0.1, key=k_param)
    out_train = jax.block_until_ready(
        mod_train(query, key, value, mask, dropout_seed=123))
    assert out_train.shape == (B, S, n_units)
    assert bool(jnp.all(jnp.isfinite(out_train)))

    print("KERNEL_OK")
</pallas_src>

<mosaic_0001>
module attributes {stable_mosaic.version = 11 : i64} {
  func.func @_proj_head_kernel(%arg0: i32, %arg1: i32, %arg2: i32, %arg3: memref<1x8x32xf32, #tpu.memory_space<vmem>>, %arg4: memref<1x32x8xbf16, #tpu.memory_space<vmem>>, %arg5: memref<1x1x8xf32, #tpu.memory_space<vmem>>, %arg6: memref<1x1x8x8xbf16, #tpu.memory_space<vmem>>) attributes {dimension_semantics = [#tpu.dimension_semantics<parallel>, #tpu.dimension_semantics<parallel>, #tpu.dimension_semantics<parallel>], iteration_bounds = array<i64: 2, 1, 4>, scalar_prefetch = 0 : i64, scratch_operands = 0 : i64, tpu.core_type = #tpu.core_type<tc>, window_params = [{transform_indices = @transform_0, window_bounds = array<i64: 1, 8, 32>}, {transform_indices = @transform_1, window_bounds = array<i64: 1, 32, 8>}, {transform_indices = @transform_2, window_bounds = array<i64: 1, 1, 8>}, {transform_indices = @transform_3, window_bounds = array<i64: 1, 1, 8, 8>}]} {
    %c0 = arith.constant 0 : index
    %c0_0 = arith.constant 0 : index
    %c0_1 = arith.constant 0 : index
    %0 = vector.load %arg3[%c0, %c0_0, %c0_1] : memref<1x8x32xf32, #tpu.memory_space<vmem>>, vector<1x8x32xf32>
    %1 = vector.shape_cast %0 : vector<1x8x32xf32> to vector<8x32xf32>
    %2 = arith.truncf %1 : vector<8x32xf32> to vector<8x32xbf16>
    %c0_2 = arith.constant 0 : index
    %c0_3 = arith.constant 0 : index
    %c0_4 = arith.constant 0 : index
    %3 = vector.load %arg4[%c0_2, %c0_3, %c0_4] : memref<1x32x8xbf16, #tpu.memory_space<vmem>>, vector<1x32x8xbf16>
    %4 = vector.shape_cast %3 : vector<1x32x8xbf16> to vector<32x8xbf16>
    %cst = arith.constant dense<0.000000e+00> : vector<8x8xf32>
    %5 = tpu.matmul %2, %4, %cst {dimension_numbers = #tpu.dot_dimension_numbers<[1], [0], [0], [1], [0, 0, 1, 1], [], []>} : vector<8x32xbf16>, vector<32x8xbf16>, vector<8x8xf32> -> vector<8x8xf32>
    %c0_5 = arith.constant 0 : index
    %c0_6 = arith.constant 0 : index
    %c0_7 = arith.constant 0 : index
    %6 = vector.load %arg5[%c0_5, %c0_6, %c0_7] : memref<1x1x8xf32, #tpu.memory_space<vmem>>, vector<1x1x8xf32>
    %7 = vector.shape_cast %6 : vector<1x1x8xf32> to vector<1x8xf32>
    %8 = vector.broadcast %7 : vector<1x8xf32> to vector<8x8xf32>
    %9 = arith.addf %5, %8 : vector<8x8xf32>
    %10 = arith.truncf %9 : vector<8x8xf32> to vector<8x8xbf16>
    %c0_8 = arith.constant 0 : index
    %c0_9 = arith.constant 0 : index
    %c0_10 = arith.constant 0 : index
    %c0_11 = arith.constant 0 : index
    %11 = vector.load %arg6[%c0_8, %c0_9, %c0_10, %c0_11] : memref<1x1x8x8xbf16, #tpu.memory_space<vmem>>, vector<1x1x8x8xbf16>
    %12 = vector.shape_cast %11 : vector<1x1x8x8xbf16> to vector<8x8xbf16>
    %13 = vector.shape_cast %10 : vector<8x8xbf16> to vector<1x1x8x8xbf16>
    tpu.vector_store %arg6[%c0_8, %c0_9, %c0_10, %c0_11], %13 {strides = array<i32>} : memref<1x1x8x8xbf16, #tpu.memory_space<vmem>>, vector<1x1x8x8xbf16>,
    return
  }
  func.func @transform_0(%arg0: i32, %arg1: i32, %arg2: i32) -> (i32, i32, i32) {
    %c0_i32 = arith.constant 0 : i32
    %c0_i32_0 = arith.constant 0 : i32
    return %arg0, %arg1, %c0_i32 : i32, i32, i32
  }
  func.func @transform_1(%arg0: i32, %arg1: i32, %arg2: i32) -> (i32, i32, i32) {
    %c0_i32 = arith.constant 0 : i32
    %c0_i32_0 = arith.constant 0 : i32
    %c0_i32_1 = arith.constant 0 : i32
    return %arg2, %c0_i32, %c0_i32_0 : i32, i32, i32
  }
  func.func @transform_2(%arg0: i32, %arg1: i32, %arg2: i32) -> (i32, i32, i32) {
    %c0_i32 = arith.constant 0 : i32
    %c0_i32_0 = arith.constant 0 : i32
    %c0_i32_1 = arith.constant 0 : i32
    return %arg2, %c0_i32, %c0_i32_0 : i32, i32, i32
  }
  func.func @transform_3(%arg0: i32, %arg1: i32, %arg2: i32) -> (i32, i32, i32, i32) {
    %c0_i32 = arith.constant 0 : i32
    %c0_i32_0 = arith.constant 0 : i32
    return %arg0, %arg2, %arg1, %c0_i32 : i32, i32, i32, i32
  }
}

</mosaic_0001>

<llo_original>
// kernel: tpu_custom_call.1
$region0: #{tpu_custom_call.1}
  #allocation0 [shape = 'u32[]', space=smem, size = 0x4, offset = 0x4, fixed_abs, tag = 'smem constant byte address 0x4 - core index']
  #allocation1 [shape = 'u32[72,128]{1,0:T(1,128)}', space=vmem, size = 0x9000, scoped, tag = 'internal scratch']
  %s0 = inlined_call_operand.vmem [shape: f32[2,8,32], index: 0, kind: input, shape index: {}]
  %s1 = inlined_call_operand.vmem [shape: bf16[4,32,8], index: 1, kind: input, shape index: {}]
  %s2 = inlined_call_operand.vmem [shape: f32[4,1,8], index: 2, kind: input, shape index: {}]
  %s3 = inlined_call_operand.hbm [shape: bf16[2,4,8,8], index: 3, kind: output, shape index: {}]
  %s4 = sld [smem:[#allocation0]]
  $region45: #{tpu_custom_call.1} parent=0
    _
  %s6 = ssub.s32 1, %s4
  %s7 = scalar_select 0, %s6, %s4
  $region1: #{tpu_custom_call.1} parent=0
    #allocation2 [shape = 'u8[4096]{0}', space=vmem, size = 0x1000, scoped, tag = 'output window, operand 0']
    #allocation3 [shape = 's32[2]{0}', space=sflag, size = 0x8, scoped, tag = 'scoped memory for tpu_custom_call.1']
    %8 = vsyncpa [#allocation3], 0
    %s9 = scalar_lea.sflag [#allocation3], 1
    %10 = vsyncpa %s9, 0
    loop: start=0, step=1, limit=10
    $region2: #{tpu_custom_call.1} parent=1 // loop_pre_header
      _
    $region3: #{tpu_custom_call.1} parent=1 // loop_header
      %s12 = sphi 0, %s16
      %p13 = scmp.ge.s32.totalorder %s12, 10
      %s19 = sphi 0, %s38
      %s20 = sphi 0, %s34
      %s21 = sphi 0, %s30
      %s22 = sphi 0, %s19
      %s23 = sphi 0, %s20
      %s24 = sphi 0, %s21
      %s25 = sphi 0, %s22
      %s26 = sphi 0, %s23
      %s27 = sphi 0, %s24
      %s43 = sphi 0, %s45
      %s46 = sphi 0, %s43
      %s47 = sphi 0, %s46
      %s63 = sphi 0, %s47
      %s69 = sphi 0, %s71
      %s72 = sphi 0, %s69
      %s73 = sphi 0, %s72
      %s89 = sphi 0, %s73
      %s95 = sphi 0, %s97
      %s98 = sphi 0, %s95
      %s99 = sphi 0, %s98
      %s115 = sphi 0, %s99
      %s125 = sphi 0, %s127
      %s128 = sphi 0, %s125
      %s129 = sphi 0, %s128
      %s145 = sphi 0, %s129
    $region4: #{tpu_custom_call.1} parent=1 // loop_header_branch
      %15 = sbr.rel (%p13) target = $region8
    $region5: #{tpu_custom_call.1} parent=1 // loop_body
      %s17 = ssub.s32 %s12, 1
      %s18 = ssub.s32 %s12, 2
      %s28 = sadd.s32 1, %s21
      %p29 = scmp.ge.s32.totalorder %s28, 4
      %s30 = scalar_select %p29, 0, %s28
      %s31 = sadd.s32 1, %s20
      %s32 = scalar_select %p29, %s31, %s20
      %p33 = scmp.ge.s32.totalorder %s32, 1
      %s34 = scalar_select %p33, 0, %s32
      %s35 = sadd.s32 1, %s19
      %s36 = scalar_select %p33, %s35, %s19
      %p37 = scmp.ge.s32.totalorder %s36, 2
      %s38 = scalar_select %p37, 0, %s36
      %s39 = ssub.s32 %s19, %s38
      %s40 = ssub.s32 %s20, %s34
      %s41 = sor.u32 %s39, %s40
      %p42 = scmp.eq.s32.totalorder %s41, 0
      %s44 = sadd.s32 %s43, 1
      %s45 = scalar_select %p42, %s43, %s44
      %p48 = pneg %p42
      %p49 = scmp.eq.s32.totalorder %s12, 7
      %p50 = por %p48, %p49
      %p51 = scmp.ne.s32.totalorder %s43, %s46
      %p52 = scmp.eq.s32.totalorder %s12, 0
      %p53 = por %p51, %p52
      %p54 = scmp.ne.s32.totalorder %s43, %s46
      %p55 = scmp.eq.s32.totalorder %s17, 7
      %p56 = por %p54, %p55
      %p57 = scmp.ne.s32.totalorder %s46, %s47
      %p58 = scmp.eq.s32.totalorder %s17, 0
      %p59 = por %p57, %p58
      %p60 = scmp.ne.s32.totalorder %s46, %s47
      %p61 = scmp.eq.s32.totalorder %s18, 7
      %p62 = por %p60, %p61
      %p64 = scmp.ne.s32.totalorder %s47, %s63
      %p65 = scmp.eq.s32.totalorder %s18, 0
      %p66 = por %p64, %p65
      %s67 = ssub.s32 %s21, %s30
      %p68 = scmp.eq.s32.totalorder %s67, 0
      %s70 = sadd.s32 %s69, 1
      %s71 = scalar_select %p68, %s69, %s70
      %p74 = pneg %p68
      %p75 = scmp.eq.s32.totalorder %s12, 7
      %p76 = por %p74, %p75
      %p77 = scmp.ne.s32.totalorder %s69, %s72
      %p78 = scmp.eq.s32.totalorder %s12, 0
      %p79 = por %p77, %p78
      %p80 = scmp.ne.s32.totalorder %s69, %s72
      %p81 = scmp.eq.s32.totalorder %s17, 7
      %p82 = por %p80, %p81
      %p83 = scmp.ne.s32.totalorder %s72, %s73
      %p84 = scmp.eq.s32.totalorder %s17, 0
      %p85 = por %p83, %p84
      %p86 = scmp.ne.s32.totalorder %s72, %s73
      %p87 = scmp.eq.s32.totalorder %s18, 7
      %p88 = por %p86, %p87
      %p90 = scmp.ne.s32.totalorder %s73, %s89
      %p91 = scmp.eq.s32.totalorder %s18, 0
      %p92 = por %p90, %p91
      %s93 = ssub.s32 %s21, %s30
      %p94 = scmp.eq.s32.totalorder %s93, 0
      %s96 = sadd.s32 %s95, 1
      %s97 = scalar_select %p94, %s95, %s96
      %p100 = pneg %p94
      %p101 = scmp.eq.s32.totalorder %s12, 7
      %p102 = por %p100, %p101
      %p103 = scmp.ne.s32.totalorder %s95, %s98
      %p104 = scmp.eq.s32.totalorder %s12, 0
      %p105 = por %p103, %p104
      %p106 = scmp.ne.s32.totalorder %s95, %s98
      %p107 = scmp.eq.s32.totalorder %s17, 7
      %p108 = por %p106, %p107
      %p109 = scmp.ne.s32.totalorder %s98, %s99
      %p110 = scmp.eq.s32.totalorder %s17, 0
      %p111 = por %p109, %p110
      %p112 = scmp.ne.s32.totalorder %s98, %s99
      %p113 = scmp.eq.s32.totalorder %s18, 7
      %p114 = por %p112, %p113
      %p116 = scmp.ne.s32.totalorder %s99, %s115
      %p117 = scmp.eq.s32.totalorder %s18, 0
      %p118 = por %p116, %p117
      %s119 = ssub.s32 %s19, %s38
      %s120 = ssub.s32 %s21, %s30
      %s121 = sor.u32 %s119, %s120
      %s122 = ssub.s32 %s20, %s34
      %s123 = sor.u32 %s121, %s122
      %p124 = scmp.eq.s32.totalorder %s123, 0
      %s126 = sadd.s32 %s125, 1
      %s127 = scalar_select %p124, %s125, %s126
      %p130 = pneg %p124
      %p131 = scmp.eq.s32.totalorder %s12, 7
      %p132 = por %p130, %p131
      %p133 = scmp.ne.s32.totalorder %s125, %s128
      %p134 = scmp.eq.s32.totalorder %s12, 0
      %p135 = por %p133, %p134
      %p136 = scmp.ne.s32.totalorder %s125, %s128
      %p137 = scmp.eq.s32.totalorder %s17, 7
      %p138 = por %p136, %p137
      %p139 = scmp.ne.s32.totalorder %s128, %s129
      %p140 = scmp.eq.s32.totalorder %s17, 0
      %p141 = por %p139, %p140
      %p142 = scmp.ne.s32.totalorder %s128, %s129
      %p143 = scmp.eq.s32.totalorder %s18, 7
      %p144 = por %p142, %p143
      %p146 = scmp.ne.s32.totalorder %s129, %s145
      %p147 = scmp.eq.s32.totalorder %s18, 0
      %p148 = por %p146, %p147
      %p149 = scmp.le.s32.totalorder 1, %s12
      %p150 = scmp.lt.s32.totalorder %s12, 9
      %p151 = pnand %p149, %p150
      %p152 = pneg %p151
      // Predicated region
      $region9: #{tpu_custom_call.1} parent=5 // pred_check
        _
      $region10: #{tpu_custom_call.1} parent=5 // pred_check_branch
        %154 = sbr.rel (%p151) target = $region12
      $region11: #{tpu_custom_call.1} parent=5 // pred_region
        %s155 = ssub.s32 %s12, 1
      $region12: #{tpu_custom_call.1} parent=5 // pred_fallthru
        _
      %p156 = scmp.lt.s32.totalorder %s12, 8
      // Predicated region
      $region13: #{tpu_custom_call.1} parent=5 // pred_check
        %p157 = pneg %p156
      $region14: #{tpu_custom_call.1} parent=5 // pred_check_branch
        %159 = sbr.rel (%p157) target = $region16
      $region15: #{tpu_custom_call.1} parent=5 // pred_region
        // Predicated region
        $region17: #{tpu_custom_call.1} parent=15 // pred_check
          %p160 = pneg %p53
        $region18: #{tpu_custom_call.1} parent=15 // pred_check_branch
          %162 = sbr.rel (%p160) target = $region20
        $region19: #{tpu_custom_call.1} parent=15 // pred_region
          %p163 = scmp.lt.s32.totalorder %s19, 1
          %s164 = scalar_select %p163, %s19, 1
          %p165 = scmp.lt.s32.totalorder %s20, 0
          %s166 = scalar_select %p165, %s20, 0
          %s167 = sadd.s32 %s166, %s164
          %s168 = smul.addr %s167, 8
          %s169 = scalar_lea.vmem %s0, %s168
        $region20: #{tpu_custom_call.1} parent=15 // pred_fallthru
          _
        // Predicated region
        $region21: #{tpu_custom_call.1} parent=15 // pred_check
          %p170 = pneg %p79
        $region22: #{tpu_custom_call.1} parent=15 // pred_check_branch
          %172 = sbr.rel (%p170) target = $region24
        $region23: #{tpu_custom_call.1} parent=15 // pred_region
          %p173 = scmp.lt.s32.totalorder %s21, 3
          %s174 = scalar_select %p173, %s21, 3
          %s175 = smul.addr %s174, 4
          %s176 = smul.addr %s175, 4
          %s177 = scalar_lea.vmem %s1, %s176
        $region24: #{tpu_custom_call.1} parent=15 // pred_fallthru
          _
        // Predicated region
        $region25: #{tpu_custom_call.1} parent=15 // pred_check
          %p178 = pneg %p105
        $region26: #{tpu_custom_call.1} parent=15 // pred_check_branch
          %180 = sbr.rel (%p178) target = $region28
        $region27: #{tpu_custom_call.1} parent=15 // pred_region
          %p181 = scmp.lt.s32.totalorder %s21, 3
          %s182 = scalar_select %p181, %s21, 3
          %s183 = scalar_lea.vmem %s2, %s182
        $region28: #{tpu_custom_call.1} parent=15 // pred_fallthru
          _
      $region16: #{tpu_custom_call.1} parent=5 // pred_fallthru
        _
      %p184 = scmp.le.s32.totalorder 1, %s12
      %p185 = scmp.lt.s32.totalorder %s12, 9
      %p186 = pnand %p184, %p185
      %p187 = pneg %p186
      // Predicated region
      $region29: #{tpu_custom_call.1} parent=5 // pred_check
        _
      $region30: #{tpu_custom_call.1} parent=5 // pred_check_branch
        %189 = sbr.rel (%p186) target = $region32
      $region31: #{tpu_custom_call.1} parent=5 // pred_region
        %s190 = ssub.s32 %s12, 1
        %p191 = scmp.lt.s32.totalorder %s22, 1
        %s192 = scalar_select %p191, %s22, 1
        %p193 = scmp.lt.s32.totalorder %s23, 0
        %s194 = scalar_select %p193, %s23, 0
        %s195 = sadd.s32 %s194, %s192
        %s196 = smul.addr %s195, 8
        %s197 = scalar_lea.vmem %s0, %s196
        %p198 = pneg %p59
        %p199 = pneg %p56
        %p200 = scmp.lt.s32.totalorder %s24, 3
        %s201 = scalar_select %p200, %s24, 3
        %s202 = smul.addr %s201, 4
        %s203 = smul.addr %s202, 4
        %s204 = scalar_lea.vmem %s1, %s203
        %p205 = pneg %p85
        %p206 = pneg %p82
        %p207 = scmp.lt.s32.totalorder %s24, 3
        %s208 = scalar_select %p207, %s24, 3
        %s209 = scalar_lea.vmem %s2, %s208
        %p210 = pneg %p111
        %p211 = pneg %p108
        %p212 = pneg %p141
        %p213 = pneg %p138
        %s214 = sand.u32 %s128, 1
        %s215 = scalar_lea.sflag [#allocation3], %s214
        %s216 = sand.u32 %s128, 1
        %s217 = smul.addr %s216, 4
        %s218 = scalar_lea.vmem [#allocation2], %s217
        %p219 = scmp.lt.s32.totalorder %s22, 1
        %s220 = scalar_select %p219, %s22, 1
        %p221 = scmp.lt.s32.totalorder %s23, 0
        %s222 = scalar_select %p221, %s23, 0
        %s223 = sadd.s32 %s222, %s220
        %s224 = smul.addr %s223, 8
        %s225 = scalar_lea.vmem %s0, %s224
        %p226 = scmp.lt.s32.totalorder %s24, 3
        %s227 = scalar_select %p226, %s24, 3
        %s228 = smul.addr %s227, 4
        %s229 = smul.addr %s228, 4
        %s230 = scalar_lea.vmem %s1, %s229
        %p231 = scmp.lt.s32.totalorder %s24, 3
        %s232 = scalar_select %p231, %s24, 3
        %s233 = scalar_lea.vmem %s2, %s232
        %v235 = vld [vmem:[%s225] sm:$0xff]
        %v236 = vpack.c.bf16 %v235, %v235
        %v237 = vld [vmem:[%s230] sm:$0xf]
        %v238 = vld [vmem:[%s230 + $0x4] sm:$0xf]
        %v239 = vld [vmem:[%s230 + $0x8] sm:$0xf]
        %v240 = vld [vmem:[%s230 + $0xc] sm:$0xf]
        %v241 = vld [vmem:[%s233] sm:$0x1]
        %v243 = vperm.slane %v241, 0
        %v249 = vunpack.c.l.b16 %v237
        %v250 = vunpack.c.l.b16 %v238
        %v251 = vunpack.c.l.b16 %v239
        %v252 = vunpack.c.l.b16 %v240
        %v253 = vpack.c.b16 %v250, %v249
        %v254 = vpack.c.b16 %v252, %v251
        %vm257 = vcmask 261120
        %v259 = vsel %vm257, %v236, 0
        %261 = vmatpush.bf16.msra.mxu0 0
        %262 = vmatpush.bf16.msra.mxu0 0
        %263 = vmatpush.bf16.msra.mxu0 0
        %264 = vmatpush.bf16.msra.mxu0 0
        %265 = vmatpush.bf16.msra.mxu0 0
        %266 = vmatpush.bf16.msra.mxu0 0
        %267 = vmatpush.bf16.msra.mxu0 %v254
        %268 = vmatpush.bf16.msra.mxu0 %v253
        %269 = vmatmul.bf16.gmra.mxu0 %v259
        %v270 = vpop.f32.mrf.mxu0
        %v271 = vadd.f32 %v243, %v270
        %v272 = vpop.f32.mrf.mxu0
        %273 = vdwg.mxu0
        %v274 = vpack.c.bf16 %v271, %v271
        %vm275 = vcmask 60416
        %276 = vst.msk [vmem:[%s218] sm:$0xf] %vm275, %v274
        %s277 = sand.u32 %s128, 1
        %s278 = scalar_lea.sflag [#allocation3], %s277
        %s279 = sand.u32 %s128, 1
        %s280 = smul.addr %s279, 4
        %s281 = scalar_lea.vmem [#allocation2], %s280
        // Predicated region
        $region33: #{tpu_custom_call.1} parent=31 // pred_check
          %p282 = pneg %p138
        $region34: #{tpu_custom_call.1} parent=31 // pred_check_branch
          %284 = sbr.rel (%p282) target = $region36
        $region35: #{tpu_custom_call.1} parent=31 // pred_region
          %286 = vsyncadd %s278, 0
          %s287 = sadd.s32 %s23, %s24
          %s288 = smul.addr %s22, 4
          %s289 = sadd.s32 %s287, %s288
          %s290 = smul.addr %s289, 4
          %s291 = scalar_lea.hbm %s3, %s290
          %s293 = sshll.u32 %s281, 4
          %s294 = int_to_ptr.vmem [resolvable:$true] %s293
          %s295 = sshll.u32 %s291, 4
          %s296 = int_to_ptr.hbm [resolvable:$true] %s295
          %298 = dma.vmem_to_hbm [thread:$0]  %s294, 64, %s296, %s278
        $region36: #{tpu_custom_call.1} parent=31 // pred_fallthru
          _
      $region32: #{tpu_custom_call.1} parent=5 // pred_fallthru
        _
      %p299 = scmp.le.s32.totalorder 2, %s12
      // Predicated region
      $region37: #{tpu_custom_call.1} parent=5 // pred_check
        %p300 = pneg %p299
      $region38: #{tpu_custom_call.1} parent=5 // pred_check_branch
        %302 = sbr.rel (%p300) target = $region40
      $region39: #{tpu_custom_call.1} parent=5 // pred_region
        %s303 = ssub.s32 %s12, 2
        // Predicated region
        $region41: #{tpu_custom_call.1} parent=39 // pred_check
          %p304 = pneg %p144
        $region42: #{tpu_custom_call.1} parent=39 // pred_check_branch
          %306 = sbr.rel (%p304) target = $region44
        $region43: #{tpu_custom_call.1} parent=39 // pred_region
          %s307 = sand.u32 %s129, 1
          %s308 = scalar_lea.sflag [#allocation3], %s307
          %s309 = sand.u32 %s129, 1
          %s310 = smul.addr %s309, 4
          %s311 = scalar_lea.vmem [#allocation2], %s310
          %313 = dma.done %s308, 64
        $region44: #{tpu_custom_call.1} parent=39 // pred_fallthru
          _
      $region40: #{tpu_custom_call.1} parent=5 // pred_fallthru
        _
    $region6: #{tpu_custom_call.1} parent=1 // loop_footer
      %s16 = sadd.s32 1, %s12
    $region7: #{tpu_custom_call.1} parent=1 // loop_footer_branch
      %11 = sbr.rel target = $region3
    $region8: #{tpu_custom_call.1} parent=1 // loop_exit
      _
    %314 = vsyncpa [#allocation3], 1
    %s315 = scalar_lea.sflag [#allocation3], 1
    %316 = vsyncpa %s315, 1

</llo_original>
